<compile_context>
chip_gen: v6e
topology: v6e:2x2x1
jax: 0.10.0
libtpu: 0.0.40
codegen_flags: <defaults>
</compile_context>

<pallas_src>
import jax
import jax.numpy as jnp
from jax import lax
from jax.experimental import pallas as pl
from jax.experimental.pallas import tpu as pltpu

C = 16       # channels after the 1x1 transpose conv (== conv1 in/out channels)
K = 3        # conv1 kernel size
KK = K * K
DIL = 2      # conv1 dilation
PAD = 1      # conv1 padding
LANE = 128


def _round_up(a, b):
    return ((a + b - 1) // b) * b


def _fused_kernel(w_ref, t_ref, o_ref):
    """Single invocation: one small MXU matmul per image plane.

    w_ref : (C, KK)          folded conv weights, tap index t = ky*K + kx
    t_ref : (N, KK, WFLAT)   pre-shifted tap stack (lane-aligned, zero-padded)
    o_ref : (N, C, WFLAT)    lane-dense flat output slab; flat index q = h*Wp + w
    """
    w = w_ref[...]                                     # (C, KK) f32
    for b in range(t_ref.shape[0]):                    # static tiny batch loop
        o_ref[b] = jnp.dot(
            w, t_ref[b], preferred_element_type=jnp.float32
        ).astype(o_ref.dtype)


def fold_weights(wt_convt, w_conv):
    """Fold the 1x1 ConvTranspose (1 -> C, no bias) into conv1's weights.

    Depends only on weights, so it is computed once outside the per-call path.
      W_eff[o, ky, kx] = sum_c w_conv[o, c, ky, kx] * wt[c]
    Returned layout: (C, K*K), tap-major columns (t = ky*K + kx).
    """
    wt_vec = wt_convt[0, :, 0, 0]                                   # (C,)
    w_eff = (w_conv * wt_vec[None, :, None, None]).sum(axis=1)      # (Cout, K, K)
    return w_eff.reshape(C, KK).astype(jnp.float32)


def model_forward(x, w_eff2d):
    """x: (N, 1, H, W) NCHW; w_eff2d: (C, K*K). Returns (N, C, H-2, W-2)."""
    n, cin, hh, ww = x.shape
    assert cin == 1
    hout = hh + 2 * PAD - (DIL * (K - 1) + 1) + 1        # H - 2
    wout = ww + 2 * PAD - (DIL * (K - 1) + 1) + 1        # W - 2
    assert hout > 0 and wout > 0, "spatial dims too small for dilated 3x3 conv"
    hp, wp = hh + 2 * PAD, ww + 2 * PAD

    wflat = _round_up(hout * wp, LANE)                   # lane-dense slab width
    max_shift = DIL * (K - 1) * (wp + 1)                 # largest tap offset
    need = wflat + max_shift

    # One pad: conv padding plus enough extra zero rows at the bottom so the
    # flattened plane covers every shifted tap window (then one reshape).
    extra_rows = max(0, -(-(need - hp * wp) // wp))
    x_pad = jnp.pad(x[:, 0], ((0, 0), (PAD, PAD + extra_rows), (PAD, PAD)))
    x_flat = x_pad.reshape(n, (hp + extra_rows) * wp)    # (N, >= wflat+max_shift)

    # Pre-shifted tap stack (wrapper-side): the kernel then only does
    # tile-aligned reads and one matmul per plane -- no in-kernel rotates.
    taps = jnp.stack(
        [x_flat[:, DIL * ky * wp + DIL * kx: DIL * ky * wp + DIL * kx + wflat]
         for ky in range(K) for kx in range(K)],
        axis=1)                                          # (N, KK, WFLAT)

    cost = pl.CostEstimate(
        flops=2 * n * C * KK * wflat,
        transcendentals=0,
        bytes_accessed=4 * (n * KK * wflat + C * KK + n * C * wflat))

    out = pl.pallas_call(
        _fused_kernel,
        out_shape=jax.ShapeDtypeStruct((n, C, wflat), x.dtype),
        in_specs=[
            pl.BlockSpec(memory_space=pltpu.MemorySpace.VMEM),   # weights (C, KK)
            pl.BlockSpec(memory_space=pltpu.MemorySpace.VMEM),   # taps (N, KK, WFLAT)
        ],
        out_specs=pl.BlockSpec(memory_space=pltpu.MemorySpace.VMEM),
        cost_estimate=cost,
    )(w_eff2d, taps)

    # Un-flatten: flat position q = h*Wp + w; only w < Wout is valid output
    # (columns >= Wout and positions >= hout*Wp contain wrap-around garbage
    # and are sliced off here -- the slab itself must not be consumed raw).
    out = out[:, :, :hout * wp].reshape(n, C, hout, wp)[:, :, :, :wout]
    return out                                           # (N, C, Hout, Wout)


def reference_forward(x, wt_convt, w_conv):
    # Pure-JAX reference for validation.
    v1 = x * wt_convt[0, :, 0, 0][None, :, None, None]   # convT(1->C, k=1, no bias)
    v2 = lax.conv_general_dilated(
        v1, w_conv, window_strides=(1, 1),
        padding=((PAD, PAD), (PAD, PAD)), rhs_dilation=(DIL, DIL),
        dimension_numbers=("NCHW", "OIHW", "NCHW"),
        precision=lax.Precision.HIGHEST)
    return v2


if __name__ == "__main__":
    key = jax.random.PRNGKey(0)
    kx, kwt, kw = jax.random.split(key, 3)

    # Small shapes consistent with the module (conv_t1 has a single input channel).
    x = jax.random.normal(kx, (2, 1, 16, 16), jnp.float32)
    wt_convt = jax.random.normal(kwt, (1, C, 1, 1), jnp.float32) * 0.5
    w_conv = jax.random.normal(kw, (C, C, K, K), jnp.float32) * (1.0 / (C * K * K) ** 0.5)

    # Weights-only folding, hoisted out of the per-call path (computed once).
    w_eff2d = fold_weights(wt_convt, w_conv)

    out = jax.jit(model_forward)(x, w_eff2d)
    out = jax.block_until_ready(out)

    ref = reference_forward(x, wt_convt, w_conv)
    if not bool(jnp.allclose(out, ref, atol=1e-4, rtol=1e-4)):
        raise AssertionError("Pallas kernel output mismatch vs JAX reference")
    print("KERNEL_OK")
</pallas_src>

<mosaic_0001>
module attributes {stable_mosaic.version = 11 : i64} {
  func.func @_fused_kernel(%arg0: memref<16x9xf32, #tpu.memory_space<vmem>>, %arg1: memref<2x9x256xf32, #tpu.memory_space<vmem>>, %arg2: memref<2x16x256xf32, #tpu.memory_space<vmem>>) attributes {dimension_semantics = [], scalar_prefetch = 0 : i64, scratch_operands = 0 : i64, tpu.core_type = #tpu.core_type<tc>} {
    %c0 = arith.constant 0 : index
    %c0_0 = arith.constant 0 : index
    %0 = vector.load %arg0[%c0, %c0_0] : memref<16x9xf32, #tpu.memory_space<vmem>>, vector<16x9xf32>
    %c0_1 = arith.constant 0 : index
    %c0_2 = arith.constant 0 : index
    %c0_3 = arith.constant 0 : index
    %1 = vector.load %arg1[%c0_1, %c0_2, %c0_3] : memref<2x9x256xf32, #tpu.memory_space<vmem>>, vector<1x9x256xf32>
    %2 = vector.shape_cast %1 : vector<1x9x256xf32> to vector<9x256xf32>
    %cst = arith.constant dense<0.000000e+00> : vector<16x256xf32>
    %3 = tpu.matmul %0, %2, %cst {dimension_numbers = #tpu.dot_dimension_numbers<[1], [0], [0], [1], [0, 0, 1, 1], [], []>} : vector<16x9xf32>, vector<9x256xf32>, vector<16x256xf32> -> vector<16x256xf32>
    %c0_4 = arith.constant 0 : index
    %c0_5 = arith.constant 0 : index
    %c0_6 = arith.constant 0 : index
    %4 = vector.load %arg2[%c0_4, %c0_5, %c0_6] : memref<2x16x256xf32, #tpu.memory_space<vmem>>, vector<1x16x256xf32>
    %5 = vector.shape_cast %4 : vector<1x16x256xf32> to vector<16x256xf32>
    %6 = vector.shape_cast %3 : vector<16x256xf32> to vector<1x16x256xf32>
    tpu.vector_store %arg2[%c0_4, %c0_5, %c0_6], %6 {strides = array<i32>} : memref<2x16x256xf32, #tpu.memory_space<vmem>>, vector<1x16x256xf32>,
    %c1 = arith.constant 1 : index
    %c0_7 = arith.constant 0 : index
    %c0_8 = arith.constant 0 : index
    %7 = vector.load %arg1[%c1, %c0_7, %c0_8] : memref<2x9x256xf32, #tpu.memory_space<vmem>>, vector<1x9x256xf32>
    %8 = vector.shape_cast %7 : vector<1x9x256xf32> to vector<9x256xf32>
    %cst_9 = arith.constant dense<0.000000e+00> : vector<16x256xf32>
    %9 = tpu.matmul %0, %8, %cst_9 {dimension_numbers = #tpu.dot_dimension_numbers<[1], [0], [0], [1], [0, 0, 1, 1], [], []>} : vector<16x9xf32>, vector<9x256xf32>, vector<16x256xf32> -> vector<16x256xf32>
    %c1_10 = arith.constant 1 : index
    %c0_11 = arith.constant 0 : index
    %c0_12 = arith.constant 0 : index
    %10 = vector.load %arg2[%c1_10, %c0_11, %c0_12] : memref<2x16x256xf32, #tpu.memory_space<vmem>>, vector<1x16x256xf32>
    %11 = vector.shape_cast %10 : vector<1x16x256xf32> to vector<16x256xf32>
    %12 = vector.shape_cast %9 : vector<16x256xf32> to vector<1x16x256xf32>
    tpu.vector_store %arg2[%c1_10, %c0_11, %c0_12], %12 {strides = array<i32>} : memref<2x16x256xf32, #tpu.memory_space<vmem>>, vector<1x16x256xf32>,
    return
  }
}

</mosaic_0001>

<llo_original>
// kernel: model_forward.1
$region0: #{model_forward.1}
  #allocation0 [shape = 'u32[]', space=smem, size = 0x4, offset = 0x4, fixed_abs, tag = 'smem constant byte address 0x4 - core index']
  #allocation1 [shape = 'u32[144,128]{1,0:T(1,128)}', space=vmem, size = 0x12000, scoped, tag = 'internal scratch']
  %s0 = inlined_call_operand.vmem [shape: f32[16,9], index: 0, kind: input, shape index: {}]
  %s1 = inlined_call_operand.vmem [shape: f32[2,9,256], index: 1, kind: input, shape index: {}]
  %s2 = inlined_call_operand.vmem [shape: f32[2,16,256], index: 2, kind: output, shape index: {}]
  %s3 = sld [smem:[#allocation0]]
  $region18: #{model_forward.1} parent=0
    _
  %s5 = ssub.s32 1, %s3
  %s6 = scalar_select 0, %s5, %s3
  // Predicated region
  $region2: #{model_forward.1} parent=0 // pred_check
    _
  $region3: #{model_forward.1} parent=0 // pred_check_branch
    %8 = sbr.rel (0) target = $region5
  $region4: #{model_forward.1} parent=0 // pred_region
    _
  $region5: #{model_forward.1} parent=0 // pred_fallthru
    _
  // Predicated region
  $region6: #{model_forward.1} parent=0 // pred_check
    _
  $region7: #{model_forward.1} parent=0 // pred_check_branch
    %10 = sbr.rel (0) target = $region9
  $region8: #{model_forward.1} parent=0 // pred_region
    _
  $region9: #{model_forward.1} parent=0 // pred_fallthru
    _
  %v11 = vld [vmem:[%s0] sm:$0xff]
  %v12 = vld [vmem:[%s0 + $0x8] sm:$0xff]
  %v13 = vld [vmem:[%s1] sm:$0xff]
  %v14 = vld [vmem:[%s1 + $0x8] sm:$0xff]
  %v15 = vld [vmem:[%s1 + $0x10] sm:$0x1]
  %v16 = vld [vmem:[%s1 + $0x18] sm:$0x1]
  %vm17 = vcmask 72704
  %v19 = vsel %vm17, %v11, 0
  %v22 = vsel %vm17, %v12, 0
  %vm24 = vcmask 1040384
  %v26 = vsel %vm24, %v15, 0
  %v29 = vsel %vm24, %v16, 0
  %31 = vmatprep.subr.mxu0 0.0
  %32 = vmatpush1.msra.mxu0 0.0
  %33 = vmatprep.subr.mxu0 0.0
  %34 = vmatpush1.msra.mxu0 0.0
  %35 = vmatprep.subr.mxu0 0.0
  %36 = vmatpush1.msra.mxu0 0.0
  %37 = vmatprep.subr.mxu0 0.0
  %38 = vmatpush1.msra.mxu0 0.0
  %39 = vmatprep.subr.mxu0 0.0
  %40 = vmatpush1.msra.mxu0 0.0
  %41 = vmatprep.subr.mxu0 0.0
  %42 = vmatpush1.msra.mxu0 0.0
  %43 = vmatprep.subr.mxu0 0.0
  %44 = vmatpush1.msra.mxu0 0.0
  %45 = vmatprep.subr.mxu0 0.0
  %46 = vmatpush1.msra.mxu0 0.0
  %47 = vmatprep.subr.mxu0 0.0
  %48 = vmatpush1.msra.mxu0 0.0
  %49 = vmatprep.subr.mxu0 0.0
  %50 = vmatpush1.msra.mxu0 0.0
  %51 = vmatprep.subr.mxu0 0.0
  %52 = vmatpush1.msra.mxu0 0.0
  %53 = vmatprep.subr.mxu0 0.0
  %54 = vmatpush1.msra.mxu0 0.0
  %55 = vmatprep.subr.mxu0 0.0
  %56 = vmatpush1.msra.mxu0 0.0
  %57 = vmatprep.subr.mxu0 0.0
  %58 = vmatpush1.msra.mxu0 0.0
  %59 = vmatprep.subr.mxu0 %v29
  %60 = vmatpush1.msra.mxu0 %v26
  %61 = vmatprep.subr.mxu0 %v14
  %62 = vmatpush1.msra.mxu0 %v13
  %63 = vmatprep.subr.mxu0 0.0
  %64 = vmatpush2.msra.mxu0 0.0
  %65 = vmatprep.subr.mxu0 0.0
  %66 = vmatpush2.msra.mxu0 0.0
  %67 = vmatprep.subr.mxu0 0.0
  %68 = vmatpush2.msra.mxu0 0.0
  %69 = vmatprep.subr.mxu0 0.0
  %70 = vmatpush2.msra.mxu0 0.0
  %71 = vmatprep.subr.mxu0 0.0
  %72 = vmatpush2.msra.mxu0 0.0
  %73 = vmatprep.subr.mxu0 0.0
  %74 = vmatpush2.msra.mxu0 0.0
  %75 = vmatprep.subr.mxu0 0.0
  %76 = vmatpush2.msra.mxu0 0.0
  %77 = vmatprep.subr.mxu0 0.0
  %78 = vmatpush2.msra.mxu0 0.0
  %79 = vmatprep.subr.mxu0 0.0
  %80 = vmatpush2.msra.mxu0 0.0
  %81 = vmatprep.subr.mxu0 0.0
  %82 = vmatpush2.msra.mxu0 0.0
  %83 = vmatprep.subr.mxu0 0.0
  %84 = vmatpush2.msra.mxu0 0.0
  %85 = vmatprep.subr.mxu0 0.0
  %86 = vmatpush2.msra.mxu0 0.0
  %87 = vmatprep.subr.mxu0 0.0
  %88 = vmatpush2.msra.mxu0 0.0
  %89 = vmatprep.subr.mxu0 0.0
  %90 = vmatpush2.msra.mxu0 0.0
  %91 = vmatprep.subr.mxu0 0.0
  %92 = vmatpush2.msra.mxu0 0.0
  %93 = vmatprep.subr.mxu0 0.0
  %94 = vmatpush2.msra.mxu0 0.0
  %95 = vmatprep.mubr.f32.mxu0 0.0
  %96 = vmatmul.mubr.f32.gmra.mxu0 %v19
  %v97 = vpop.f32.mrf.mxu0
  %v98 = vadd.f32 0.0, %v97
  %v99 = vpop.f32.mrf.mxu0
  %v100 = vadd.f32 0.0, %v99
  %101 = vmatprep.mubr.f32.mxu0 0.0
  %102 = vmatmul.mubr.f32.gmra.mxu0 %v22
  %v103 = vpop.f32.mrf.mxu0
  %v104 = vadd.f32 0.0, %v103
  %v105 = vpop.f32.mrf.mxu0
  %v106 = vadd.f32 0.0, %v105
  %107 = vdwg.mxu0
  %108 = vst [vmem:[%s2] sm:$0xff] %v98
  %109 = vst [vmem:[%s2 + $0x8] sm:$0xff] %v100
  %110 = vst [vmem:[%s2 + $0x10] sm:$0xff] %v104
  %111 = vst [vmem:[%s2 + $0x18] sm:$0xff] %v106
  %s112 = scalar_lea.vmem %s1, 32
  %v113 = vld [vmem:[%s112] sm:$0xff]
  %v114 = vld [vmem:[%s112 + $0x8] sm:$0xff]
  %v115 = vld [vmem:[%s112 + $0x10] sm:$0x1]
  %v116 = vld [vmem:[%s112 + $0x18] sm:$0x1]
  %v118 = vsel %vm24, %v115, 0
  %v121 = vsel %vm24, %v116, 0
  %123 = vmatprep.subr.mxu0 0.0
  %124 = vmatpush1.msra.mxu0 0.0
  %125 = vmatprep.subr.mxu0 0.0
  %126 = vmatpush1.msra.mxu0 0.0
  %127 = vmatprep.subr.mxu0 0.0
  %128 = vmatpush1.msra.mxu0 0.0
  %129 = vmatprep.subr.mxu0 0.0
  %130 = vmatpush1.msra.mxu0 0.0
  %131 = vmatprep.subr.mxu0 0.0
  %132 = vmatpush1.msra.mxu0 0.0
  %133 = vmatprep.subr.mxu0 0.0
  %134 = vmatpush1.msra.mxu0 0.0
  %135 = vmatprep.subr.mxu0 0.0
  %136 = vmatpush1.msra.mxu0 0.0
  %137 = vmatprep.subr.mxu0 0.0
  %138 = vmatpush1.msra.mxu0 0.0
  %139 = vmatprep.subr.mxu0 0.0
  %140 = vmatpush1.msra.mxu0 0.0
  %141 = vmatprep.subr.mxu0 0.0
  %142 = vmatpush1.msra.mxu0 0.0
  %143 = vmatprep.subr.mxu0 0.0
  %144 = vmatpush1.msra.mxu0 0.0
  %145 = vmatprep.subr.mxu0 0.0
  %146 = vmatpush1.msra.mxu0 0.0
  %147 = vmatprep.subr.mxu0 0.0
  %148 = vmatpush1.msra.mxu0 0.0
  %149 = vmatprep.subr.mxu0 0.0
  %150 = vmatpush1.msra.mxu0 0.0
  %151 = vmatprep.subr.mxu0 %v121
  %152 = vmatpush1.msra.mxu0 %v118
  %153 = vmatprep.subr.mxu0 %v114
  %154 = vmatpush1.msra.mxu0 %v113
  %155 = vmatprep.subr.mxu0 0.0
  %156 = vmatpush2.msra.mxu0 0.0
  %157 = vmatprep.subr.mxu0 0.0
  %158 = vmatpush2.msra.mxu0 0.0
  %159 = vmatprep.subr.mxu0 0.0
  %160 = vmatpush2.msra.mxu0 0.0
  %161 = vmatprep.subr.mxu0 0.0
  %162 = vmatpush2.msra.mxu0 0.0
  %163 = vmatprep.subr.mxu0 0.0
  %164 = vmatpush2.msra.mxu0 0.0
  %165 = vmatprep.subr.mxu0 0.0
  %166 = vmatpush2.msra.mxu0 0.0
  %167 = vmatprep.subr.mxu0 0.0
  %168 = vmatpush2.msra.mxu0 0.0
  %169 = vmatprep.subr.mxu0 0.0
  %170 = vmatpush2.msra.mxu0 0.0
  %171 = vmatprep.subr.mxu0 0.0
  %172 = vmatpush2.msra.mxu0 0.0
  %173 = vmatprep.subr.mxu0 0.0
  %174 = vmatpush2.msra.mxu0 0.0
  %175 = vmatprep.subr.mxu0 0.0
  %176 = vmatpush2.msra.mxu0 0.0
  %177 = vmatprep.subr.mxu0 0.0
  %178 = vmatpush2.msra.mxu0 0.0
  %179 = vmatprep.subr.mxu0 0.0
  %180 = vmatpush2.msra.mxu0 0.0
  %181 = vmatprep.subr.mxu0 0.0
  %182 = vmatpush2.msra.mxu0 0.0
  %183 = vmatprep.subr.mxu0 0.0
  %184 = vmatpush2.msra.mxu0 0.0
  %185 = vmatprep.subr.mxu0 0.0
  %186 = vmatpush2.msra.mxu0 0.0
  %187 = vmatprep.mubr.f32.mxu0 0.0
  %188 = vmatmul.mubr.f32.gmra.mxu0 %v19
  %v189 = vpop.f32.mrf.mxu0
  %v190 = vadd.f32 0.0, %v189
  %v191 = vpop.f32.mrf.mxu0
  %v192 = vadd.f32 0.0, %v191
  %193 = vmatprep.mubr.f32.mxu0 0.0
  %194 = vmatmul.mubr.f32.gmra.mxu0 %v22
  %v195 = vpop.f32.mrf.mxu0
  %v196 = vadd.f32 0.0, %v195
  %v197 = vpop.f32.mrf.mxu0
  %v198 = vadd.f32 0.0, %v197
  %199 = vdwg.mxu0
  %s200 = scalar_lea.vmem %s2, 32
  %201 = vst [vmem:[%s200] sm:$0xff] %v190
  %202 = vst [vmem:[%s200 + $0x8] sm:$0xff] %v192
  %203 = vst [vmem:[%s200 + $0x10] sm:$0xff] %v196
  %204 = vst [vmem:[%s200 + $0x18] sm:$0xff] %v198
  // Predicated region
  $region10: #{model_forward.1} parent=0 // pred_check
    _
  $region11: #{model_forward.1} parent=0 // pred_check_branch
    %206 = sbr.rel (0) target = $region13
  $region12: #{model_forward.1} parent=0 // pred_region
    _
  $region13: #{model_forward.1} parent=0 // pred_fallthru
    _
  // Predicated region
  $region14: #{model_forward.1} parent=0 // pred_check
    _
  $region15: #{model_forward.1} parent=0 // pred_check_branch
    %208 = sbr.rel (0) target = $region17
  $region16: #{model_forward.1} parent=0 // pred_region
    _
  $region17: #{model_forward.1} parent=0 // pred_fallthru
    _

</llo_original>
